<compile_context>
chip_gen: v6e
topology: v6e:2x2x1
jax: 0.10.0
libtpu: 0.0.40
codegen_flags: <defaults>
</compile_context>

<pallas_src>
import functools

import jax
import jax.numpy as jnp
from jax.experimental import pallas as pl
from jax.experimental.pallas import tpu as pltpu

LANE = 128
SUBLANE = 8


def _round_up(x, m):
    return (x + m - 1) // m * m


def _round_down(x, m):
    return x // m * m


def _cdiv(a, b):
    return -(-a // b)


# ----------------------------------------------------------------------------
# Kernel 1: fused path (>=2 batch tiles, or a single spatial tile).
#   grid = (batch tiles, spatial tiles), reduction axis innermost.
# ----------------------------------------------------------------------------
def _cam_fused_kernel(x_ref, w_ref, b_ref, o_ref, acc_ref, *, hw, thw, mask_tail):
    # x_ref  : (tb, C, thw)  input dtype (f32 / bf16)
    # w_ref  : (C, NCP)      resident; 1/HW already folded in
    # b_ref  : (1, NCP)      resident
    # o_ref  : (tb, NCP)     f32, lane-dense
    # acc_ref: (tb, C)       f32 scratch (partial pooled sums)
    k = pl.program_id(1)

    @pl.when(k == 0)
    def _init():
        acc_ref[...] = jnp.zeros_like(acc_ref)

    x = x_ref[...].astype(jnp.float32)                       # (tb, C, thw)
    if mask_tail:
        offs = jax.lax.broadcasted_iota(jnp.int32, (1, 1, thw), 2) + k * thw
        x = jnp.where(offs < hw, x, 0.0)                     # zero undefined lanes
    acc_ref[...] += jnp.sum(x, axis=-1)                      # (tb, C)

    @pl.when(k == pl.num_programs(1) - 1)
    def _finalize():
        out = jnp.dot(acc_ref[...], w_ref[...].astype(jnp.float32),
                      preferred_element_type=jnp.float32)
        o_ref[...] = out + b_ref[...]


# ----------------------------------------------------------------------------
# Kernel 2: split-reduction path (single batch tile, >=2 spatial tiles).
#   grid = (nsplit parallel, spatial tiles per split); emits per-split partial
#   pooled sums; the tiny matmul + combine happens in XLA afterwards.
# ----------------------------------------------------------------------------
def _cam_partial_kernel(x_ref, o_ref, acc_ref, *, hw, thw, nk_per_split):
    # x_ref  : (B, C, thw)
    # o_ref  : (1, B, C)   f32 partial pooled sums for this split
    # acc_ref: (B, C)      f32 scratch
    s = pl.program_id(0)
    k = pl.program_id(1)

    @pl.when(k == 0)
    def _init():
        acc_ref[...] = jnp.zeros_like(acc_ref)

    kg = s * nk_per_split + k                                # global spatial tile
    x = x_ref[...].astype(jnp.float32)
    # Mask both the HW tail and whole tiles past the real tile count (the x
    # index_map clamps so the DMA stays in bounds; contributions are zeroed).
    offs = jax.lax.broadcasted_iota(jnp.int32, (1, 1, thw), 2) + kg * thw
    x = jnp.where(offs < hw, x, 0.0)
    acc_ref[...] += jnp.sum(x, axis=-1)

    @pl.when(k == nk_per_split - 1)
    def _finalize():
        o_ref[...] = acc_ref[...][None, :, :]


# ----------------------------------------------------------------------------
# Wrapper
# ----------------------------------------------------------------------------
def cam_forward(x, weight, bias, *, tb=None, thw=None, vmem_limit_bytes=None,
                weight_bf16_threshold_bytes=2 * 1024 * 1024):
    """x: (B, C, H, W); weight: (num_classes, C); bias: (num_classes,).

    Returns (B, num_classes) float32, matching the PyTorch CAM forward.
    """
    B, C, H, W = map(int, x.shape)
    NC = int(weight.shape[0])
    HW = H * W
    itemsize = jnp.dtype(x.dtype).itemsize
    user_thw = thw

    # ---- VMEM budget -------------------------------------------------------
    try:
        vmem_cap = int(pltpu.get_tpu_info().vmem_capacity_bytes)
    except Exception:
        vmem_cap = 64 * 1024 * 1024                      # conservative (v7x per-TC)
    if vmem_limit_bytes is None:
        vmem_limit_bytes = min(vmem_cap - (8 << 20), 64 << 20)
    vmem_limit_bytes = int(vmem_limit_bytes)

    NCP = _round_up(NC, LANE)                            # lane-dense classifier cols
    w_dtype = (jnp.bfloat16 if C * NCP * 4 > weight_bf16_threshold_bytes
               else jnp.float32)
    w_itemsize = jnp.dtype(w_dtype).itemsize
    resident = 2 * (C * NCP * w_itemsize + NCP * 4)      # weight+bias, double-buffered

    avail = max(0, vmem_limit_bytes - resident - (2 << 20))
    per_block_budget = max(128 * 1024, min(8 * 1024 * 1024, avail // 2))

    # ---- tile auto-sizing (co-solve thw and tb) -----------------------------
    if thw is None:
        row_bytes_full = C * HW * itemsize               # one batch row, thw = HW
        if row_bytes_full <= per_block_budget:
            thw = HW                                     # full spatial extent
        else:
            rows = B if B <= SUBLANE else SUBLANE
            fit = per_block_budget // max(1, rows * C * itemsize)
            thw = max(LANE, _round_down(int(fit), LANE))
    thw = int(thw)
    if thw >= HW:
        thw = HW                                         # full extent: no lane padding
    else:
        thw = max(LANE, _round_down(thw, LANE))
        if thw >= HW:
            thw = HW

    if tb is None:
        blk_rows = per_block_budget // max(1, C * thw * itemsize)
        tb = B if blk_rows >= B else max(SUBLANE, _round_down(int(blk_rows), SUBLANE))
    tb = int(min(max(1, int(tb)), B))
    if tb < B:
        tb = max(SUBLANE, _round_down(tb, SUBLANE))      # sublane-legal output block
        tb = min(tb, B)

    # If the tb>=8 floor blew the budget, shrink the spatial tile instead.
    if (user_thw is None and thw > LANE
            and tb * C * thw * itemsize > per_block_budget):
        shr = per_block_budget // max(1, tb * C * itemsize)
        thw = max(LANE, _round_down(int(shr), LANE))
        if thw >= HW:
            thw = HW

    nb = _cdiv(B, tb)
    nk = _cdiv(HW, thw)
    use_split = (nb == 1) and (nk >= 2)                  # small-batch megacore path

    # Raise the scoped VMEM limit to what the chosen tiles actually need.
    x_block_bytes = tb * C * thw * itemsize
    acc_bytes = _round_up(tb, SUBLANE) * _round_up(C, LANE) * 4
    out_block_bytes = 2 * tb * max(NCP, _round_up(C, LANE)) * 4
    required = 2 * x_block_bytes + resident + acc_bytes + out_block_bytes + (2 << 20)
    vmem_limit_bytes = int(min(max(vmem_limit_bytes, required), vmem_cap))

    # ---- classifier weight prep (1/HW folded in) ----------------------------
    # TODO(synk): in a real deployment precompute the transposed/scaled weight
    # once outside the per-call path instead of rebuilding it every call.
    inv_hw = 1.0 / float(HW)
    w_t = jnp.transpose(weight).astype(jnp.float32) * inv_hw        # (C, NC)
    x_flat = x.reshape(B, C, HW)

    if use_split:
        # ---- split-reduction path: per-split partial pooled sums -----------
        nsplit = 2
        nk_per_split = _cdiv(nk, nsplit)
        kernel = functools.partial(_cam_partial_kernel, hw=HW, thw=thw,
                                   nk_per_split=nk_per_split)
        partial_sums = pl.pallas_call(
            kernel,
            out_shape=jax.ShapeDtypeStruct((nsplit, B, C), jnp.float32),
            grid_spec=pltpu.PrefetchScalarGridSpec(
                num_scalar_prefetch=0,
                grid=(nsplit, nk_per_split),
                in_specs=[
                    pl.BlockSpec(
                        (B, C, thw),
                        lambda s, k: (0, 0,
                                      jnp.minimum(s * nk_per_split + k, nk - 1))),
                ],
                out_specs=pl.BlockSpec((1, B, C), lambda s, k: (s, 0, 0)),
                scratch_shapes=[pltpu.VMEM((B, C), jnp.float32)],
            ),
            compiler_params=pltpu.CompilerParams(
                dimension_semantics=("parallel", "arbitrary"),
                vmem_limit_bytes=vmem_limit_bytes,
            ),
        )(x_flat)
        pooled = jnp.sum(partial_sums, axis=0)                      # (B, C) sums
        return pooled @ w_t + bias.astype(jnp.float32)              # (B, NC)

    # ---- fused path: matmul + bias inside the kernel ------------------------
    w_p = jnp.zeros((C, NCP), w_dtype).at[:, :NC].set(w_t.astype(w_dtype))
    b_p = jnp.zeros((1, NCP), jnp.float32).at[:, :NC].set(
        bias.astype(jnp.float32)[None, :])
    kernel = functools.partial(_cam_fused_kernel, hw=HW, thw=thw,
                               mask_tail=(nk * thw != HW))
    out = pl.pallas_call(
        kernel,
        out_shape=jax.ShapeDtypeStruct((B, NCP), jnp.float32),
        grid_spec=pltpu.PrefetchScalarGridSpec(
            num_scalar_prefetch=0,
            grid=(nb, nk),
            in_specs=[
                pl.BlockSpec((tb, C, thw), lambda i, k: (i, 0, k)),
                pl.BlockSpec((C, NCP), lambda i, k: (0, 0)),        # resident
                pl.BlockSpec((1, NCP), lambda i, k: (0, 0)),        # resident
            ],
            out_specs=pl.BlockSpec((tb, NCP), lambda i, k: (i, 0)),
            scratch_shapes=[pltpu.VMEM((tb, C), jnp.float32)],
        ),
        compiler_params=pltpu.CompilerParams(
            dimension_semantics=("parallel", "arbitrary"),
            vmem_limit_bytes=vmem_limit_bytes,
        ),
    )(x_flat, w_p, b_p)
    return out[:, :NC]


def reference_cam(x, weight, bias):
    pooled = jnp.mean(x.astype(jnp.float32), axis=(2, 3))           # (B, C)
    return pooled @ weight.astype(jnp.float32).T + bias.astype(jnp.float32)


if __name__ == "__main__":
    key = jax.random.PRNGKey(0)
    kx, kw, kb, kx2 = jax.random.split(key, 4)

    B, C, H, W = 2, 4, 16, 16
    num_classes = 3
    x = jax.random.normal(kx, (B, C, H, W), dtype=jnp.float32)
    bound = 1.0 / float(C) ** 0.5
    weight = jax.random.uniform(kw, (num_classes, C), jnp.float32, -bound, bound)
    bias = jax.random.uniform(kb, (num_classes,), jnp.float32, -bound, bound)

    ref = reference_cam(x, weight, bias)

    # 1) Auto-tiled: whole spatial extent in one block, fused matmul path.
    out = jax.block_until_ready(cam_forward(x, weight, bias))
    assert out.shape == (B, num_classes), out.shape
    assert jnp.allclose(out, ref, atol=1e-4, rtol=1e-4), (out, ref)

    # 2) Forced spatial tiling, single batch tile -> split-reduction
    #    (megacore) path with partial-sum combine.
    out2 = jax.block_until_ready(cam_forward(x, weight, bias, tb=8, thw=128))
    assert jnp.allclose(out2, ref, atol=1e-4, rtol=1e-4), (out2, ref)

    # 3) Non-multiple spatial extent -> in-kernel tail masking (split path).
    x3 = jax.random.normal(kx2, (2, 4, 15, 15), dtype=jnp.float32)
    ref3 = reference_cam(x3, weight, bias)
    out3 = jax.block_until_ready(cam_forward(x3, weight, bias, thw=128))
    assert jnp.allclose(out3, ref3, atol=1e-4, rtol=1e-4), (out3, ref3)

    # 4) Multiple batch tiles + tail masking -> fused path with mask.
    x4 = jax.random.normal(kx2, (16, 4, 15, 15), dtype=jnp.float32)
    ref4 = reference_cam(x4, weight, bias)
    out4 = jax.block_until_ready(cam_forward(x4, weight, bias, tb=8, thw=128))
    assert jnp.allclose(out4, ref4, atol=1e-4, rtol=1e-4), (out4, ref4)

    print("KERNEL_OK")
</pallas_src>

<mosaic_0001>
module attributes {stable_mosaic.version = 11 : i64} {
  func.func @_cam_fused_kernel(%arg0: i32, %arg1: i32, %arg2: memref<2x4x256xf32, #tpu.memory_space<vmem>>, %arg3: memref<4x128xf32, #tpu.memory_space<vmem>>, %arg4: memref<1x128xf32, #tpu.memory_space<vmem>>, %arg5: memref<2x128xf32, #tpu.memory_space<vmem>>, %arg6: memref<2x4xf32, #tpu.memory_space<vmem>>) attributes {dimension_semantics = [#tpu.dimension_semantics<parallel>, #tpu.dimension_semantics<arbitrary>], iteration_bounds = array<i64: 1, 1>, scalar_prefetch = 0 : i64, scratch_operands = 1 : i64, tpu.core_type = #tpu.core_type<tc>, window_params = [{transform_indices = @transform_0, window_bounds = array<i64: 2, 4, 256>}, {pipeline_mode = #tpu.pipeline_mode<synchronous>, transform_indices = @transform_1, window_bounds = array<i64: 4, 128>}, {pipeline_mode = #tpu.pipeline_mode<synchronous>, transform_indices = @transform_2, window_bounds = array<i64: 1, 128>}, {transform_indices = @transform_3, window_bounds = array<i64: 2, 128>}]} {
    %c0_i32 = arith.constant 0 : i32
    %0 = arith.cmpi eq, %arg1, %c0_i32 : i32
    %1 = arith.extui %0 : i1 to i32
    %c0_i32_0 = arith.constant 0 : i32
    %2 = arith.cmpi ne, %1, %c0_i32_0 : i32
    scf.if %2 {
      %cst_9 = arith.constant 0.000000e+00 : f32
      %11 = vector.broadcast %cst_9 : f32 to vector<2x4xf32>
      %c0_10 = arith.constant 0 : index
      %c0_11 = arith.constant 0 : index
      %12 = vector.load %arg6[%c0_10, %c0_11] : memref<2x4xf32, #tpu.memory_space<vmem>>, vector<2x4xf32>
      tpu.vector_store %arg6[%c0_10, %c0_11], %11 {strides = array<i32>} : memref<2x4xf32, #tpu.memory_space<vmem>>, vector<2x4xf32>,
    } else {
    }
    %c0 = arith.constant 0 : index
    %c0_1 = arith.constant 0 : index
    %c0_2 = arith.constant 0 : index
    %3 = vector.load %arg2[%c0, %c0_1, %c0_2] : memref<2x4x256xf32, #tpu.memory_space<vmem>>, vector<2x4x256xf32>
    %c0_3 = arith.constant 0 : index
    %c0_4 = arith.constant 0 : index
    %4 = vector.load %arg6[%c0_3, %c0_4] : memref<2x4xf32, #tpu.memory_space<vmem>>, vector<2x4xf32>
    %cst = arith.constant dense<0.000000e+00> : vector<2x4xf32>
    %5 = vector.multi_reduction <add>, %3, %cst [2] : vector<2x4x256xf32> to vector<2x4xf32>
    %6 = arith.addf %4, %5 : vector<2x4xf32>
    %c0_5 = arith.constant 0 : index
    %c0_6 = arith.constant 0 : index
    %7 = vector.load %arg6[%c0_5, %c0_6] : memref<2x4xf32, #tpu.memory_space<vmem>>, vector<2x4xf32>
    tpu.vector_store %arg6[%c0_5, %c0_6], %6 {strides = array<i32>} : memref<2x4xf32, #tpu.memory_space<vmem>>, vector<2x4xf32>,
    %c0_i32_7 = arith.constant 0 : i32
    %8 = arith.cmpi eq, %arg1, %c0_i32_7 : i32
    %9 = arith.extui %8 : i1 to i32
    %c0_i32_8 = arith.constant 0 : i32
    %10 = arith.cmpi ne, %9, %c0_i32_8 : i32
    scf.if %10 {
      %c0_9 = arith.constant 0 : index
      %c0_10 = arith.constant 0 : index
      %11 = vector.load %arg6[%c0_9, %c0_10] : memref<2x4xf32, #tpu.memory_space<vmem>>, vector<2x4xf32>
      %c0_11 = arith.constant 0 : index
      %c0_12 = arith.constant 0 : index
      %12 = vector.load %arg3[%c0_11, %c0_12] : memref<4x128xf32, #tpu.memory_space<vmem>>, vector<4x128xf32>
      %cst_13 = arith.constant dense<0.000000e+00> : vector<2x128xf32>
      %13 = tpu.matmul %11, %12, %cst_13 {dimension_numbers = #tpu.dot_dimension_numbers<[1], [0], [0], [1], [0, 0, 1, 1], [], []>} : vector<2x4xf32>, vector<4x128xf32>, vector<2x128xf32> -> vector<2x128xf32>
      %c0_14 = arith.constant 0 : index
      %c0_15 = arith.constant 0 : index
      %14 = vector.load %arg4[%c0_14, %c0_15] : memref<1x128xf32, #tpu.memory_space<vmem>>, vector<1x128xf32>
      %15 = vector.broadcast %14 : vector<1x128xf32> to vector<2x128xf32>
      %16 = arith.addf %13, %15 : vector<2x128xf32>
      %c0_16 = arith.constant 0 : index
      %c0_17 = arith.constant 0 : index
      %17 = vector.load %arg5[%c0_16, %c0_17] : memref<2x128xf32, #tpu.memory_space<vmem>>, vector<2x128xf32>
      tpu.vector_store %arg5[%c0_16, %c0_17], %16 {strides = array<i32>} : memref<2x128xf32, #tpu.memory_space<vmem>>, vector<2x128xf32>,
    } else {
    }
    return
  }
  func.func @transform_0(%arg0: i32, %arg1: i32) -> (i32, i32, i32) {
    %c0_i32 = arith.constant 0 : i32
    %c0_i32_0 = arith.constant 0 : i32
    return %arg0, %c0_i32, %arg1 : i32, i32, i32
  }
  func.func @transform_1(%arg0: i32, %arg1: i32) -> (i32, i32) {
    %c0_i32 = arith.constant 0 : i32
    %c0_i32_0 = arith.constant 0 : i32
    %c0_i32_1 = arith.constant 0 : i32
    return %c0_i32, %c0_i32_0 : i32, i32
  }
  func.func @transform_2(%arg0: i32, %arg1: i32) -> (i32, i32) {
    %c0_i32 = arith.constant 0 : i32
    %c0_i32_0 = arith.constant 0 : i32
    %c0_i32_1 = arith.constant 0 : i32
    return %c0_i32, %c0_i32_0 : i32, i32
  }
  func.func @transform_3(%arg0: i32, %arg1: i32) -> (i32, i32) {
    %c0_i32 = arith.constant 0 : i32
    %c0_i32_0 = arith.constant 0 : i32
    return %arg0, %c0_i32 : i32, i32
  }
}

</mosaic_0001>

<llo_original>
// kernel: tpu_custom_call.1
$region0: #{tpu_custom_call.1}
  #allocation0 [shape = 'u32[]', space=smem, size = 0x4, offset = 0x4, fixed_abs, tag = 'smem constant byte address 0x4 - core index']
  #allocation1 [shape = 'u32[144,128]{1,0:T(1,128)}', space=vmem, size = 0x12000, scoped, tag = 'internal scratch']
  #allocation2 [shape = 'f32[2,4]{1,0:T(2,128)}', space=vmem, size = 0x400, scoped, tag = 'scratch operand']
  %s0 = inlined_call_operand.hbm [shape: f32[2,4,256], index: 0, kind: input, shape index: {}]
  %s1 = inlined_call_operand.hbm [shape: f32[4,128], index: 1, kind: input, shape index: {}]
  %s2 = inlined_call_operand.vmem [shape: f32[1,128], index: 2, kind: input, shape index: {}]
  %s3 = inlined_call_operand.hbm [shape: f32[2,128], index: 3, kind: output, shape index: {}]
  %s4 = sld [smem:[#allocation0]]
  $region38: #{tpu_custom_call.1} parent=0
    _
  %s6 = ssub.s32 1, %s4
  %s7 = scalar_select 0, %s6, %s4
  $region1: #{tpu_custom_call.1} parent=0
    #allocation3 [shape = 'u8[8192]{0}', space=vmem, size = 0x2000, scoped, tag = 'input window, operand 0, single buffered']
    #allocation4 [shape = 's32[1]{0}', space=sflag, size = 0x4, scoped, tag = 'scoped memory for tpu_custom_call.1']
    #allocation5 [shape = 's32[1]{0}', space=sflag, size = 0x4, scoped, tag = 'scoped memory for tpu_custom_call.1']
    #allocation6 [shape = 'u8[2048]{0}', space=vmem, size = 0x800, scoped, tag = 'input window, operand 1, single buffered']
    #allocation7 [shape = 's32[1]{0}', space=sflag, size = 0x4, scoped, tag = 'scoped memory for tpu_custom_call.1']
    #allocation8 [shape = 'u8[1024]{0}', space=vmem, size = 0x400, scoped, tag = 'output window, operand 0, single buffered']
    %8 = vsyncpa [#allocation4], 0
    %9 = vsyncpa [#allocation7], 0
    %10 = vsyncpa [#allocation5], 0
    // Predicated region
    $region2: #{tpu_custom_call.1} parent=1 // pred_check
      _
    $region3: #{tpu_custom_call.1} parent=1 // pred_check_branch
      %12 = sbr.rel (0) target = $region5
    $region4: #{tpu_custom_call.1} parent=1 // pred_region
      %s14 = ssub.s32 256, 256
      %15 = vsyncadd [#allocation4], %s14
      %s16 = sshll.u32 [#allocation3], 4
      %s17 = int_to_ptr.vmem [resolvable:$true] %s16
      %22 = dma.hbm_to_vmem [thread:$0]  %s0, 256, %s17, [#allocation4], 128, 128, 8
    $region5: #{tpu_custom_call.1} parent=1 // pred_fallthru
      _
    // Predicated region
    $region6: #{tpu_custom_call.1} parent=1 // pred_check
      _
    $region7: #{tpu_custom_call.1} parent=1 // pred_check_branch
      %24 = sbr.rel (0) target = $region9
    $region8: #{tpu_custom_call.1} parent=1 // pred_region
      %s26 = ssub.s32 64, 64
      %27 = vsyncadd [#allocation7], %s26
      %s29 = sshll.u32 [#allocation6], 4
      %s30 = int_to_ptr.vmem [resolvable:$true] %s29
      %32 = dma.hbm_to_vmem [thread:$0]  %s1, 64, %s30, [#allocation7]
    $region9: #{tpu_custom_call.1} parent=1 // pred_fallthru
      _
    // Predicated region
    $region10: #{tpu_custom_call.1} parent=1 // pred_check
      _
    $region11: #{tpu_custom_call.1} parent=1 // pred_check_branch
      %34 = sbr.rel (0) target = $region13
    $region12: #{tpu_custom_call.1} parent=1 // pred_region
      _
    $region13: #{tpu_custom_call.1} parent=1 // pred_fallthru
      _
    // Predicated region
    $region14: #{tpu_custom_call.1} parent=1 // pred_check
      _
    $region15: #{tpu_custom_call.1} parent=1 // pred_check_branch
      %36 = sbr.rel (0) target = $region17
    $region16: #{tpu_custom_call.1} parent=1 // pred_region
      %37 = dma.done [#allocation4], 256
    $region17: #{tpu_custom_call.1} parent=1 // pred_fallthru
      _
    // Predicated region
    $region18: #{tpu_custom_call.1} parent=1 // pred_check
      _
    $region19: #{tpu_custom_call.1} parent=1 // pred_check_branch
      %39 = sbr.rel (0) target = $region21
    $region20: #{tpu_custom_call.1} parent=1 // pred_region
      %40 = dma.done [#allocation7], 64
    $region21: #{tpu_custom_call.1} parent=1 // pred_fallthru
      _
    %p41 = scmp.eq.s32.totalorder 0, 0
    // Predicated region
    $region22: #{tpu_custom_call.1} parent=1 // pred_check
      %p42 = pneg %p41
    $region23: #{tpu_custom_call.1} parent=1 // pred_check_branch
      %44 = sbr.rel (%p42) target = $region25
    $region24: #{tpu_custom_call.1} parent=1 // pred_region
      %vm45 = vcmask 25600
      %46 = vst.msk [vmem:[#allocation2] sm:$0x3] %vm45, 0.0
    $region25: #{tpu_custom_call.1} parent=1 // pred_fallthru
      _
    %v47 = vld [vmem:[#allocation3] sm:$0xff]
    %v48 = vld [vmem:[#allocation3 + $0x8] sm:$0xff]
    %v49 = vld [vmem:[#allocation2] sm:$0x3]
    %v52 = vcombine.high %v47, %v47
    %v53 = vcombine.high %v48, %v48
    %vm56 = vcmask 1043456
    %v57 = vsel %vm56, %v47, 0.0
    %v58 = vsel %vm56, %v52, 0.0
    %v59 = vadd.f32 %v57, %v58
    %60 = vadd.xlane.f32.xlu0 %v59
    %v61 = vpop.xlane.xlu0 %60
    %v62 = vsel %vm56, %v48, 0.0
    %v63 = vsel %vm56, %v53, 0.0
    %v64 = vadd.f32 %v62, %v63
    %65 = vadd.xlane.f32.xlu0 %v64
    %v66 = vpop.xlane.xlu0 %65
    %v69 = vlaneseq
    %v70 = vand.u32 %v69, 127
    %v71 = vlaneseq
    %v72 = vshrl.u32 %v71, 7
    %v73 = vsub.s32 %v70, %v72
    %v74 = vrot.slane %v61, %v73
    %v75 = vlaneseq
    %v76 = vshrl.u32 %v75, 7
    %v77 = vsub.s32 %v70, %v76
    %v78 = vrot.slane %v66, %v77
    %vm79 = vcmask 1041409
    %v80 = vsel %vm79, %v78, %v74
    %v82 = vadd.f32 %v49, %v80
    %vm83 = vcmask 25600
    %84 = vst.msk [vmem:[#allocation2] sm:$0x3] %vm83, %v82
    // Predicated region
    $region26: #{tpu_custom_call.1} parent=1 // pred_check
      %p85 = pneg %p41
    $region27: #{tpu_custom_call.1} parent=1 // pred_check_branch
      %87 = sbr.rel (%p85) target = $region29
    $region28: #{tpu_custom_call.1} parent=1 // pred_region
      %v88 = vld [vmem:[#allocation2] sm:$0x3]
      %v89 = vld [vmem:[#allocation6] sm:$0xf]
      %v90 = vld [vmem:[%s2] sm:$0x1]
      %v92 = vlaneseq
      %v93 = vshrl.u32 %v92, 7
      %v94 = vsub.s32 0, %v93
      %v95 = vrot.slane %v90, %v94
      %vm97 = vcmask 31744
      %v99 = vsel %vm97, %v88, 0
      %v102 = vsel %vm56, %v89, 0
      %104 = vmatprep.subr.mxu0 0.0
      %105 = vmatpush1.msra.mxu0 0.0
      %106 = vmatprep.subr.mxu0 0.0
      %107 = vmatpush1.msra.mxu0 0.0
      %108 = vmatprep.subr.mxu0 0.0
      %109 = vmatpush1.msra.mxu0 0.0
      %110 = vmatprep.subr.mxu0 0.0
      %111 = vmatpush1.msra.mxu0 0.0
      %112 = vmatprep.subr.mxu0 0.0
      %113 = vmatpush1.msra.mxu0 0.0
      %114 = vmatprep.subr.mxu0 0.0
      %115 = vmatpush1.msra.mxu0 0.0
      %116 = vmatprep.subr.mxu0 0.0
      %117 = vmatpush1.msra.mxu0 0.0
      %118 = vmatprep.subr.mxu0 0.0
      %119 = vmatpush1.msra.mxu0 0.0
      %120 = vmatprep.subr.mxu0 0.0
      %121 = vmatpush1.msra.mxu0 0.0
      %122 = vmatprep.subr.mxu0 0.0
      %123 = vmatpush1.msra.mxu0 0.0
      %124 = vmatprep.subr.mxu0 0.0
      %125 = vmatpush1.msra.mxu0 0.0
      %126 = vmatprep.subr.mxu0 0.0
      %127 = vmatpush1.msra.mxu0 0.0
      %128 = vmatprep.subr.mxu0 0.0
      %129 = vmatpush1.msra.mxu0 0.0
      %130 = vmatprep.subr.mxu0 0.0
      %131 = vmatpush1.msra.mxu0 0.0
      %132 = vmatprep.subr.mxu0 0.0
      %133 = vmatpush1.msra.mxu0 0.0
      %134 = vmatprep.subr.mxu0 0.0
      %135 = vmatpush1.msra.mxu0 %v102
      %136 = vmatprep.subr.mxu0 0.0
      %137 = vmatpush2.msra.mxu0 0.0
      %138 = vmatprep.subr.mxu0 0.0
      %139 = vmatpush2.msra.mxu0 0.0
      %140 = vmatprep.subr.mxu0 0.0
      %141 = vmatpush2.msra.mxu0 0.0
      %142 = vmatprep.subr.mxu0 0.0
      %143 = vmatpush2.msra.mxu0 0.0
      %144 = vmatprep.subr.mxu0 0.0
      %145 = vmatpush2.msra.mxu0 0.0
      %146 = vmatprep.subr.mxu0 0.0
      %147 = vmatpush2.msra.mxu0 0.0
      %148 = vmatprep.subr.mxu0 0.0
      %149 = vmatpush2.msra.mxu0 0.0
      %150 = vmatprep.subr.mxu0 0.0
      %151 = vmatpush2.msra.mxu0 0.0
      %152 = vmatprep.subr.mxu0 0.0
      %153 = vmatpush2.msra.mxu0 0.0
      %154 = vmatprep.subr.mxu0 0.0
      %155 = vmatpush2.msra.mxu0 0.0
      %156 = vmatprep.subr.mxu0 0.0
      %157 = vmatpush2.msra.mxu0 0.0
      %158 = vmatprep.subr.mxu0 0.0
      %159 = vmatpush2.msra.mxu0 0.0
      %160 = vmatprep.subr.mxu0 0.0
      %161 = vmatpush2.msra.mxu0 0.0
      %162 = vmatprep.subr.mxu0 0.0
      %163 = vmatpush2.msra.mxu0 0.0
      %164 = vmatprep.subr.mxu0 0.0
      %165 = vmatpush2.msra.mxu0 0.0
      %166 = vmatprep.subr.mxu0 0.0
      %167 = vmatpush2.msra.mxu0 0.0
      %168 = vmatprep.mubr.f32.mxu0 0.0
      %169 = vmatmul.mubr.f32.gmra.mxu0 %v99
      %v170 = vpop.f32.mrf.mxu0
      %v171 = vadd.f32 %v95, %v170
      %v172 = vpop.f32.mrf.mxu0
      %173 = vdwg.mxu0
      %174 = vst [vmem:[#allocation8] sm:$0x3] %v171
    $region29: #{tpu_custom_call.1} parent=1 // pred_fallthru
      _
    // Predicated region
    $region30: #{tpu_custom_call.1} parent=1 // pred_check
      _
    $region31: #{tpu_custom_call.1} parent=1 // pred_check_branch
      %176 = sbr.rel (0) target = $region33
    $region32: #{tpu_custom_call.1} parent=1 // pred_region
      %s178 = ssub.s32 32, 32
      %179 = vsyncadd [#allocation5], %s178
      %s181 = sshll.u32 [#allocation8], 4
      %s182 = int_to_ptr.vmem [resolvable:$true] %s181
      %184 = dma.vmem_to_hbm [thread:$0]  %s182, 32, %s3, [#allocation5]
    $region33: #{tpu_custom_call.1} parent=1 // pred_fallthru
      _
    // Predicated region
    $region34: #{tpu_custom_call.1} parent=1 // pred_check
      _
    $region35: #{tpu_custom_call.1} parent=1 // pred_check_branch
      %186 = sbr.rel (0) target = $region37
    $region36: #{tpu_custom_call.1} parent=1 // pred_region
      %187 = dma.done [#allocation5], 32
    $region37: #{tpu_custom_call.1} parent=1 // pred_fallthru
      _
    %188 = vsyncpa [#allocation4], 1
    %189 = vsyncpa [#allocation7], 1
    %190 = vsyncpa [#allocation5], 1

</llo_original>
